<compile_context>
chip_gen: v6e
topology: v6e:2x2x1
jax: 0.10.0
libtpu: 0.0.40
codegen_flags: <defaults>
</compile_context>

<pallas_src>
import jax
import jax.numpy as jnp
from jax.experimental import pallas as pl
from jax.experimental.pallas import tpu as pltpu

# ---- "config" (BaseSeqConfig equivalent), fixed deterministically ----------
INPUT_TOKEN_LEN = 32          # config.input_token_len
OUTPUT_TOKEN_LENS = (8,)      # config.output_token_lens
D_OUT = 32                    # full width of the concrete head's logits

# VMEM budget for choosing the batch tile: stay well under the 32 MiB scoped
# default (and far under v7x's 64 MiB physical VMEM) even with double
# buffering, so no vmem_limit_bytes override is needed on any generation.
_VMEM_BUDGET_BYTES = 24 << 20


def seqmodel_kernel(x_ref, w_ref, b_ref, logits_ref):
    """Fused forward: logits = x @ W + b.

    preprocess (pad/truncate) and postprocess (leading-column slice) are fused
    into the operand slices done in the wrapper, so the kernel body is a single
    MXU matmul + bias add over exactly the surviving data.

    x_ref      : (TB, k_eff)     series tile, already column-sliced (VMEM)
    w_ref      : (k_eff, d_post) head weight, pad/post-sliced (VMEM)
    b_ref      : (1, d_post)     head bias, post-sliced, f32 (VMEM)
    logits_ref : (TB, d_post)    postprocessed logits tile (VMEM)
    """
    logits = jnp.dot(x_ref[...], w_ref[...], preferred_element_type=jnp.float32)
    logits_ref[...] = (logits + b_ref[...]).astype(logits_ref.dtype)


def _choose_tile_rows(B, k_eff, in_bytes, d_post):
    """Pick the batch-tile row count from a VMEM budget (worst case: v7x)."""
    # Per grid step: double-buffered input tile + double-buffered output tile.
    per_row = 2 * k_eff * in_bytes + 2 * d_post * 4
    tb_vmem = max(16, (_VMEM_BUDGET_BYTES // per_row) // 16 * 16)
    tb_cap = min(8192, tb_vmem)        # 2048-8192 range; VMEM formula is the binder
    if B <= 256:
        # Tiny batch: one block (block_shape == full array dims is always legal);
        # the ~0.35us fixed step overhead dominates regardless of tiling.
        return B
    # Large batch: target >= ~4 grid steps so v7x's two TensorCores both get
    # work via dimension_semantics=("parallel",), but keep tiles >= 256 rows
    # to amortize per-step overhead.  On v5e/v6e (1 TC) the extra steps are
    # fully pipelined and cost is negligible.
    tb = min(tb_cap, max(256, pl.cdiv(B, 4)))
    return max(16, (tb // 16) * 16)    # multiple of 16: packed-sublane safe (bf16)


def sequence_model_forward(series, w, b, *, tile_rows=None,
                           input_dtype=jnp.float32):
    """preprocess -> forward (Pallas kernel) -> postprocess, fully fused."""
    # glue: tensor conversion + unsqueeze for 1-D input (preprocess lines 1-4)
    series = jnp.asarray(series, jnp.float32)
    if series.ndim == 1:
        series = series[None, :]
    B, L_raw = series.shape

    T = INPUT_TOKEN_LEN
    d_post = OUTPUT_TOKEN_LENS[0]
    k_eff = min(L_raw, T)

    # Fuse preprocess into the operands (exact in f32):
    #   pad(x, T) @ W  ==  x[:, :k_eff] @ W[:k_eff, :]
    # The wrapper slice also prevents the BlockSpec from DMAing the unused
    # tail columns of x when L_raw > T (the kernel is HBM-bandwidth bound).
    x_eff = series[:, :k_eff]
    # Fuse postprocess into the operands:
    #   (x @ W + b)[..., :d_post]  ==  x @ W[:, :d_post] + b[:, :d_post]
    w_eff = w[:k_eff, :d_post]
    b_eff = jnp.asarray(b[:, :d_post], jnp.float32)

    # Optional wrapper-side reduced-precision input path: casting BEFORE the
    # pallas_call halves HBM->VMEM traffic (an in-kernel cast would not).
    # Accumulation stays f32 via preferred_element_type in the kernel.
    if input_dtype != jnp.float32:
        x_eff = x_eff.astype(input_dtype)
        w_eff = w_eff.astype(input_dtype)

    in_bytes = jnp.dtype(input_dtype).itemsize
    TB = tile_rows if tile_rows is not None else _choose_tile_rows(
        B, k_eff, in_bytes, d_post)
    grid = (pl.cdiv(B, TB),)

    logits = pl.pallas_call(
        seqmodel_kernel,
        out_shape=jax.ShapeDtypeStruct((B, d_post), jnp.float32),
        grid=grid,
        in_specs=[
            pl.BlockSpec((TB, k_eff), lambda i: (i, 0)),
            pl.BlockSpec((k_eff, d_post), lambda i: (0, 0)),
            pl.BlockSpec((1, d_post), lambda i: (0, 0)),
        ],
        out_specs=pl.BlockSpec((TB, d_post), lambda i: (i, 0)),
        compiler_params=pltpu.CompilerParams(
            dimension_semantics=("parallel",)),
    )(x_eff, w_eff, b_eff)

    # postprocess already applied inside the kernel (d_post-wide logits).
    return logits


if __name__ == "__main__":
    key = jax.random.PRNGKey(0)
    k1, k2, k3, k4, k5 = jax.random.split(key, 5)

    # deterministic "weights" for the concrete head (build_layers equivalent)
    w = 0.02 * jax.random.normal(k2, (INPUT_TOKEN_LEN, D_OUT), jnp.float32)
    b = 0.02 * jax.random.normal(k3, (1, D_OUT), jnp.float32)

    d_post = OUTPUT_TOKEN_LENS[0]

    # case 1: raw series shorter than input_token_len -> zero-pad branch
    x_short = jax.random.normal(k1, (2, 24), jnp.float32)
    out_short = sequence_model_forward(x_short, w, b)
    jax.block_until_ready(out_short)
    ref_series = jnp.pad(x_short, ((0, 0), (0, INPUT_TOKEN_LEN - x_short.shape[-1])))
    ref_short = (ref_series @ w + b)[..., :d_post]
    assert out_short.shape == (2, d_post)
    assert jnp.allclose(out_short, ref_short, atol=1e-5), "pad-branch mismatch"

    # case 2: raw series longer than input_token_len -> truncate branch
    x_long = jax.random.normal(k4, (2, 40), jnp.float32)
    out_long = sequence_model_forward(x_long, w, b)
    jax.block_until_ready(out_long)
    ref_long = (x_long[:, :INPUT_TOKEN_LEN] @ w + b)[..., :d_post]
    assert out_long.shape == (2, d_post)
    assert jnp.allclose(out_long, ref_long, atol=1e-5), "truncate-branch mismatch"

    # case 3: multi-step grid with a partial trailing block
    # (B=300, forced TB=128 -> grid of 3 with a 44-row final block)
    x_big = jax.random.normal(k5, (300, 40), jnp.float32)
    out_big = sequence_model_forward(x_big, w, b, tile_rows=128)
    jax.block_until_ready(out_big)
    ref_big = (x_big[:, :INPUT_TOKEN_LEN] @ w + b)[..., :d_post]
    assert out_big.shape == (300, d_post)
    assert jnp.allclose(out_big, ref_big, atol=1e-5), "partial-block mismatch"

    # case 4: wrapper-side bf16 input path (halved HBM traffic; relaxed tol)
    out_bf16 = sequence_model_forward(x_big, w, b, tile_rows=128,
                                      input_dtype=jnp.bfloat16)
    jax.block_until_ready(out_bf16)
    assert out_bf16.shape == (300, d_post)
    assert jnp.allclose(out_bf16, ref_big, atol=3e-2, rtol=3e-2), "bf16-path mismatch"

    print("KERNEL_OK")
</pallas_src>

<mosaic_0001>
module attributes {stable_mosaic.version = 11 : i64} {
  func.func @seqmodel_kernel(%arg0: i32, %arg1: memref<2x24xf32, #tpu.memory_space<vmem>>, %arg2: memref<24x8xf32, #tpu.memory_space<vmem>>, %arg3: memref<1x8xf32, #tpu.memory_space<vmem>>, %arg4: memref<2x8xf32, #tpu.memory_space<vmem>>) attributes {dimension_semantics = [#tpu.dimension_semantics<parallel>], iteration_bounds = array<i64: 1>, scalar_prefetch = 0 : i64, scratch_operands = 0 : i64, tpu.core_type = #tpu.core_type<tc>, window_params = [{transform_indices = @transform_0, window_bounds = array<i64: 2, 24>}, {pipeline_mode = #tpu.pipeline_mode<synchronous>, transform_indices = @transform_1, window_bounds = array<i64: 24, 8>}, {pipeline_mode = #tpu.pipeline_mode<synchronous>, transform_indices = @transform_2, window_bounds = array<i64: 1, 8>}, {transform_indices = @transform_3, window_bounds = array<i64: 2, 8>}]} {
    %c0 = arith.constant 0 : index
    %c0_0 = arith.constant 0 : index
    %0 = vector.load %arg1[%c0, %c0_0] : memref<2x24xf32, #tpu.memory_space<vmem>>, vector<2x24xf32>
    %c0_1 = arith.constant 0 : index
    %c0_2 = arith.constant 0 : index
    %1 = vector.load %arg2[%c0_1, %c0_2] : memref<24x8xf32, #tpu.memory_space<vmem>>, vector<24x8xf32>
    %cst = arith.constant dense<0.000000e+00> : vector<2x8xf32>
    %2 = tpu.matmul %0, %1, %cst {dimension_numbers = #tpu.dot_dimension_numbers<[1], [0], [0], [1], [0, 0, 1, 1], [], []>} : vector<2x24xf32>, vector<24x8xf32>, vector<2x8xf32> -> vector<2x8xf32>
    %c0_3 = arith.constant 0 : index
    %c0_4 = arith.constant 0 : index
    %3 = vector.load %arg3[%c0_3, %c0_4] : memref<1x8xf32, #tpu.memory_space<vmem>>, vector<1x8xf32>
    %4 = vector.broadcast %3 : vector<1x8xf32> to vector<2x8xf32>
    %5 = arith.addf %2, %4 : vector<2x8xf32>
    %c0_5 = arith.constant 0 : index
    %c0_6 = arith.constant 0 : index
    %6 = vector.load %arg4[%c0_5, %c0_6] : memref<2x8xf32, #tpu.memory_space<vmem>>, vector<2x8xf32>
    tpu.vector_store %arg4[%c0_5, %c0_6], %5 {strides = array<i32>} : memref<2x8xf32, #tpu.memory_space<vmem>>, vector<2x8xf32>,
    return
  }
  func.func @transform_0(%arg0: i32) -> (i32, i32) {
    %c0_i32 = arith.constant 0 : i32
    %c0_i32_0 = arith.constant 0 : i32
    return %arg0, %c0_i32 : i32, i32
  }
  func.func @transform_1(%arg0: i32) -> (i32, i32) {
    %c0_i32 = arith.constant 0 : i32
    %c0_i32_0 = arith.constant 0 : i32
    %c0_i32_1 = arith.constant 0 : i32
    return %c0_i32, %c0_i32_0 : i32, i32
  }
  func.func @transform_2(%arg0: i32) -> (i32, i32) {
    %c0_i32 = arith.constant 0 : i32
    %c0_i32_0 = arith.constant 0 : i32
    %c0_i32_1 = arith.constant 0 : i32
    return %c0_i32, %c0_i32_0 : i32, i32
  }
  func.func @transform_3(%arg0: i32) -> (i32, i32) {
    %c0_i32 = arith.constant 0 : i32
    %c0_i32_0 = arith.constant 0 : i32
    return %arg0, %c0_i32 : i32, i32
  }
}

</mosaic_0001>

<llo_original>
// kernel: tpu_custom_call.1
$region0: #{tpu_custom_call.1}
  #allocation0 [shape = 'u32[]', space=smem, size = 0x4, offset = 0x4, fixed_abs, tag = 'smem constant byte address 0x4 - core index']
  #allocation1 [shape = 'u32[144,128]{1,0:T(1,128)}', space=vmem, size = 0x12000, scoped, tag = 'internal scratch']
  %s0 = inlined_call_operand.vmem [shape: f32[2,24], index: 0, kind: input, shape index: {}]
  %s1 = inlined_call_operand.vmem [shape: f32[24,8], index: 1, kind: input, shape index: {}]
  %s2 = inlined_call_operand.vmem [shape: f32[1,8], index: 2, kind: input, shape index: {}]
  %s3 = inlined_call_operand.hbm [shape: f32[2,8], index: 3, kind: output, shape index: {}]
  %s4 = sld [smem:[#allocation0]]
  $region22: #{tpu_custom_call.1} parent=0
    _
  %s6 = ssub.s32 1, %s4
  %s7 = scalar_select 0, %s6, %s4
  $region1: #{tpu_custom_call.1} parent=0
    #allocation2 [shape = 'u8[1024]{0}', space=vmem, size = 0x400, scoped, tag = 'output window, operand 0, single buffered']
    #allocation3 [shape = 's32[1]{0}', space=sflag, size = 0x4, scoped, tag = 'scoped memory for tpu_custom_call.1']
    %8 = vsyncpa [#allocation3], 0
    // Predicated region
    $region2: #{tpu_custom_call.1} parent=1 // pred_check
      _
    $region3: #{tpu_custom_call.1} parent=1 // pred_check_branch
      %10 = sbr.rel (0) target = $region5
    $region4: #{tpu_custom_call.1} parent=1 // pred_region
      _
    $region5: #{tpu_custom_call.1} parent=1 // pred_fallthru
      _
    // Predicated region
    $region6: #{tpu_custom_call.1} parent=1 // pred_check
      _
    $region7: #{tpu_custom_call.1} parent=1 // pred_check_branch
      %12 = sbr.rel (0) target = $region9
    $region8: #{tpu_custom_call.1} parent=1 // pred_region
      _
    $region9: #{tpu_custom_call.1} parent=1 // pred_fallthru
      _
    // Predicated region
    $region10: #{tpu_custom_call.1} parent=1 // pred_check
      _
    $region11: #{tpu_custom_call.1} parent=1 // pred_check_branch
      %14 = sbr.rel (0) target = $region13
    $region12: #{tpu_custom_call.1} parent=1 // pred_region
      _
    $region13: #{tpu_custom_call.1} parent=1 // pred_fallthru
      _
    %v15 = vld [vmem:[%s0] sm:$0x3]
    %v16 = vld [vmem:[%s1] sm:$0xff]
    %v17 = vld [vmem:[%s1 + $0x8] sm:$0xff]
    %v18 = vld [vmem:[%s1 + $0x10] sm:$0xff]
    %v19 = vld [vmem:[%s2] sm:$0x1]
    %v21 = vlaneseq
    %v22 = vshrl.u32 %v21, 7
    %v23 = vsub.s32 0, %v22
    %v24 = vrot.slane %v19, %v23
    %vm26 = vcmask 195584
    %v28 = vsel %vm26, %v15, 0
    %30 = vmatprep.subr.mxu0 0.0
    %31 = vmatpush1.msra.mxu0 0.0
    %32 = vmatprep.subr.mxu0 0.0
    %33 = vmatpush1.msra.mxu0 0.0
    %34 = vmatprep.subr.mxu0 0.0
    %35 = vmatpush1.msra.mxu0 0.0
    %36 = vmatprep.subr.mxu0 0.0
    %37 = vmatpush1.msra.mxu0 0.0
    %38 = vmatprep.subr.mxu0 0.0
    %39 = vmatpush1.msra.mxu0 0.0
    %40 = vmatprep.subr.mxu0 0.0
    %41 = vmatpush1.msra.mxu0 0.0
    %42 = vmatprep.subr.mxu0 0.0
    %43 = vmatpush1.msra.mxu0 0.0
    %44 = vmatprep.subr.mxu0 0.0
    %45 = vmatpush1.msra.mxu0 0.0
    %46 = vmatprep.subr.mxu0 0.0
    %47 = vmatpush1.msra.mxu0 0.0
    %48 = vmatprep.subr.mxu0 0.0
    %49 = vmatpush1.msra.mxu0 0.0
    %50 = vmatprep.subr.mxu0 0.0
    %51 = vmatpush1.msra.mxu0 0.0
    %52 = vmatprep.subr.mxu0 0.0
    %53 = vmatpush1.msra.mxu0 0.0
    %54 = vmatprep.subr.mxu0 0.0
    %55 = vmatpush1.msra.mxu0 0.0
    %56 = vmatprep.subr.mxu0 0.0
    %57 = vmatpush1.msra.mxu0 %v18
    %58 = vmatprep.subr.mxu0 0.0
    %59 = vmatpush1.msra.mxu0 %v17
    %60 = vmatprep.subr.mxu0 0.0
    %61 = vmatpush1.msra.mxu0 %v16
    %62 = vmatprep.subr.mxu0 0.0
    %63 = vmatpush2.msra.mxu0 0.0
    %64 = vmatprep.subr.mxu0 0.0
    %65 = vmatpush2.msra.mxu0 0.0
    %66 = vmatprep.subr.mxu0 0.0
    %67 = vmatpush2.msra.mxu0 0.0
    %68 = vmatprep.subr.mxu0 0.0
    %69 = vmatpush2.msra.mxu0 0.0
    %70 = vmatprep.subr.mxu0 0.0
    %71 = vmatpush2.msra.mxu0 0.0
    %72 = vmatprep.subr.mxu0 0.0
    %73 = vmatpush2.msra.mxu0 0.0
    %74 = vmatprep.subr.mxu0 0.0
    %75 = vmatpush2.msra.mxu0 0.0
    %76 = vmatprep.subr.mxu0 0.0
    %77 = vmatpush2.msra.mxu0 0.0
    %78 = vmatprep.subr.mxu0 0.0
    %79 = vmatpush2.msra.mxu0 0.0
    %80 = vmatprep.subr.mxu0 0.0
    %81 = vmatpush2.msra.mxu0 0.0
    %82 = vmatprep.subr.mxu0 0.0
    %83 = vmatpush2.msra.mxu0 0.0
    %84 = vmatprep.subr.mxu0 0.0
    %85 = vmatpush2.msra.mxu0 0.0
    %86 = vmatprep.subr.mxu0 0.0
    %87 = vmatpush2.msra.mxu0 0.0
    %88 = vmatprep.subr.mxu0 0.0
    %89 = vmatpush2.msra.mxu0 0.0
    %90 = vmatprep.subr.mxu0 0.0
    %91 = vmatpush2.msra.mxu0 0.0
    %92 = vmatprep.subr.mxu0 0.0
    %93 = vmatpush2.msra.mxu0 0.0
    %94 = vmatprep.mubr.f32.mxu0 0.0
    %95 = vmatmul.mubr.f32.gmra.mxu0 %v28
    %v96 = vpop.f32.mrf.mxu0
    %v97 = vadd.f32 %v24, %v96
    %v98 = vpop.f32.mrf.mxu0
    %99 = vdwg.mxu0
    %vm100 = vcmask 58368
    %101 = vst.msk [vmem:[#allocation2] sm:$0x3] %vm100, %v97
    // Predicated region
    $region14: #{tpu_custom_call.1} parent=1 // pred_check
      _
    $region15: #{tpu_custom_call.1} parent=1 // pred_check_branch
      %103 = sbr.rel (0) target = $region17
    $region16: #{tpu_custom_call.1} parent=1 // pred_region
      %s105 = ssub.s32 32, 32
      %106 = vsyncadd [#allocation3], %s105
      %s108 = sshll.u32 [#allocation2], 4
      %s109 = int_to_ptr.vmem [resolvable:$true] %s108
      %111 = dma.vmem_to_hbm [thread:$0]  %s109, 32, %s3, [#allocation3]
    $region17: #{tpu_custom_call.1} parent=1 // pred_fallthru
      _
    // Predicated region
    $region18: #{tpu_custom_call.1} parent=1 // pred_check
      _
    $region19: #{tpu_custom_call.1} parent=1 // pred_check_branch
      %113 = sbr.rel (0) target = $region21
    $region20: #{tpu_custom_call.1} parent=1 // pred_region
      %114 = dma.done [#allocation3], 32
    $region21: #{tpu_custom_call.1} parent=1 // pred_fallthru
      _
    %115 = vsyncpa [#allocation3], 1

</llo_original>
